<compile_context>
chip_gen: v7x
topology: tpu7x:2x2x1
jax: 0.10.0
libtpu: 0.0.40
codegen_flags: <defaults>
</compile_context>

<pallas_src>
import numpy as np
import jax
import jax.numpy as jnp
from jax import lax
from jax.experimental import pallas as pl
from jax.experimental.pallas import tpu as pltpu


# -------------------------------------------------- static-pack row layout
_R_B1 = 0          # 8 rows:  conv1 bias broadcast along lanes
_R_B2 = 8          # 16 rows: conv2 bias
_R_B3 = 24         # 1 row:   conv3 bias
_R_MASK = 25       # 9 rows:  3x3 tap validity masks (k = kh*3 + kw)
_R_LOGX = 34       # 1 row:   log(node_x) (0 where node_x == 0)
_R_LOGY = 35       # 1 row:   log(node_y)
_R_XZ = 36         # 1 row:   1.0 where node_x == 0
_R_YZ = 37         # 1 row:   1.0 where node_y == 0
_R_STATIC = 38


# ------------------------------------------------------------ fused kernel
def _make_kernel(T, s, bb):
    N = s * s
    PB = bb * N                       # pixels (lanes) per grid block
    C1, C2 = 8, 16

    def kernel(st_ref, dyn_ref, w_ref, out_ref):
        # ---------------- NodalPreprocessor: co * x^ex * y^ey, per-image max norm
        logx = st_ref[_R_LOGX:_R_LOGX + 1, :]          # (1, PB)
        logy = st_ref[_R_LOGY:_R_LOGY + 1, :]
        xz = st_ref[_R_XZ:_R_XZ + 1, :]
        yz = st_ref[_R_YZ:_R_YZ + 1, :]
        ex = dyn_ref[0:T, :]                            # (T, PB)
        ey = dyn_ref[T:2 * T, :]
        co = dyn_ref[2 * T:3 * T, :]

        pw = jnp.exp(ex * logx + ey * logy)             # one EUP exp per element
        kill = jnp.where(((xz > 0.0) & (ex > 0.0)) | ((yz > 0.0) & (ey > 0.0)),
                         0.0, 1.0)                      # 0**positive -> 0
        nodal = jnp.sum(co * pw * kill, axis=0, keepdims=True)     # (1, PB)

        # per-image max over the N lanes of each of the bb images (no reshape)
        lane = lax.broadcasted_iota(jnp.int32, (1, PB), 1)
        denom = jnp.zeros((1, PB), jnp.float32)
        for j in range(bb):
            in_img = (lane >= j * N) & (lane < (j + 1) * N)
            mx = jnp.max(jnp.where(in_img, nodal, -jnp.inf), axis=1, keepdims=True)
            denom = denom + jnp.where(in_img, mx + 1e-6, 0.0)
        img = nodal / denom                             # (1, PB)

        # ---------------- shared 3x3 im2col via lane roll + boundary masks
        masks = st_ref[_R_MASK:_R_MASK + 9, :]          # (9, PB)

        def im2col(x):                                  # x: (cin, PB) -> (9*cin, PB)
            cols = []
            for k in range(9):
                dh, dw = k // 3 - 1, k % 3 - 1
                off = dh * s + dw                       # neighbor at pixel p + off
                if off == 0:
                    cols.append(x)
                else:
                    shifted = pltpu.roll(x, (-off) % PB, axis=1)
                    cols.append(shifted * masks[k:k + 1, :])
            return jnp.concatenate(cols, axis=0)

        b1 = st_ref[_R_B1:_R_B1 + C1, :]                # (8, PB)
        b2 = st_ref[_R_B2:_R_B2 + C2, :]                # (16, PB)
        b3 = st_ref[_R_B3:_R_B3 + 1, :]                 # (1, PB)
        w1 = w_ref[0:8, 0:9]                            # (8, 9)
        w2 = w_ref[8:24, 0:72]                          # (16, 72)
        w3 = w_ref[24:32, :]                            # (8, 144), rows 1..7 zero

        # conv1 (1->8) + ReLU : single MXU matmul (8,9)@(9,PB)
        h1 = jnp.maximum(
            jnp.dot(w1, im2col(img), preferred_element_type=jnp.float32) + b1, 0.0)
        # conv2 (8->16) + ReLU : single im2col matmul (16,72)@(72,PB)
        h2 = jnp.maximum(
            jnp.dot(w2, im2col(h1), preferred_element_type=jnp.float32) + b2, 0.0)
        # conv3 (16->1) + Softplus : (8,144)@(144,PB), row 0 is the real channel
        z = jnp.dot(w3, im2col(h2), preferred_element_type=jnp.float32)[0:1, :] + b3
        # Softplus (beta=1, threshold=20), exp argument clamped
        out_ref[...] = jnp.where(z > 20.0, z,
                                 jnp.log(1.0 + jnp.exp(jnp.minimum(z, 20.0))))

    return kernel


# ----------------------------------------------------------- wrapper helpers
def _pick_bb(B, N):
    """Smallest batch-block with lane-dense (multiple-of-128) pixel count."""
    for bb in range(1, B + 1):
        if B % bb == 0 and (bb * N) % 128 == 0:
            return bb
    return B


def _build_static_pack(params, node_x, node_y, B, s):
    """Per-model static rows: biases (lane-broadcast), tap masks, log grids."""
    N = s * s
    P = B * N
    _, b1, _, b2, _, b3 = params
    x = jnp.asarray(node_x, jnp.float32).reshape(-1)
    y = jnp.asarray(node_y, jnp.float32).reshape(-1)
    logx = jnp.log(jnp.where(x > 0.0, x, 1.0))
    logy = jnp.log(jnp.where(y > 0.0, y, 1.0))
    xz = (x == 0.0).astype(jnp.float32)
    yz = (y == 0.0).astype(jnp.float32)

    n_idx = np.arange(N)
    hh, ww = n_idx // s, n_idx % s
    mask_rows = []
    for k in range(9):
        dh, dw = k // 3 - 1, k % 3 - 1
        valid = ((hh + dh >= 0) & (hh + dh < s) & (ww + dw >= 0) & (ww + dw < s))
        mask_rows.append(valid.astype(np.float32))
    masks = jnp.asarray(np.tile(np.stack(mask_rows, axis=0), (1, B)))   # (9, P)

    def tile_row(v):                                   # (N,) -> (1, P)
        return jnp.tile(v.reshape(1, N), (1, B))

    pack = jnp.concatenate([
        jnp.broadcast_to(b1.reshape(8, 1), (8, P)),
        jnp.broadcast_to(b2.reshape(16, 1), (16, P)),
        jnp.broadcast_to(b3.reshape(1, 1), (1, P)),
        masks,
        tile_row(logx), tile_row(logy), tile_row(xz), tile_row(yz),
    ], axis=0).astype(jnp.float32)
    assert pack.shape == (_R_STATIC, P)
    return pack


def _build_weight_pack(params):
    """Pack the three matmul-layout conv weights into one (32, 144) buffer."""
    w1, _, w2, _, w3, _ = params      # (8,9), (16,72), (1,144)
    pack = jnp.zeros((32, 144), jnp.float32)
    pack = pack.at[0:8, 0:9].set(w1)
    pack = pack.at[8:24, 0:72].set(w2)
    pack = pack.at[24:25, 0:144].set(w3)
    return pack


def _build_dyn_pack(exp_x, exp_y, coeff, N):
    """Per-call rows: exponents / coefficients broadcast over the N pixels."""
    B, T = exp_x.shape

    def expand(a):                                     # (B,T) -> (T, B*N)
        a = a.astype(jnp.float32).T[:, :, None]
        return jnp.broadcast_to(a, (T, B, N)).reshape(T, B * N)

    return jnp.concatenate([expand(exp_x), expand(exp_y), expand(coeff)], axis=0)


def cnn_forward(static_pack, w_pack, exp_x, exp_y, coeff, *, s, bb):
    B, T = exp_x.shape
    N = s * s
    PB = bb * N
    assert B % bb == 0
    nblk = B // bb
    dyn_pack = _build_dyn_pack(exp_x, exp_y, coeff, N)

    out = pl.pallas_call(
        _make_kernel(T, s, bb),
        out_shape=jax.ShapeDtypeStruct((1, B * N), jnp.float32),
        grid=(nblk,),
        in_specs=[
            pl.BlockSpec((_R_STATIC, PB), lambda i: (0, i)),
            pl.BlockSpec((3 * T, PB), lambda i: (0, i)),
            pl.BlockSpec((32, 144), lambda i: (0, 0)),
        ],
        out_specs=pl.BlockSpec((1, PB), lambda i: (0, i)),
        compiler_params=pltpu.CompilerParams(
            dimension_semantics=("parallel",),
            vmem_limit_bytes=32 * 1024 * 1024),
    )(static_pack, dyn_pack, w_pack)

    # metadata-only reshape to PyTorch NCHW (B, 1, s, s)
    return out.reshape(B, 1, s, s)


# ------------------------------------------------------------- parameter init
def init_params(key):
    def conv_init(k, cout, cin, ksz=3):
        kw, kb = jax.random.split(k)
        fan_in = cin * ksz * ksz
        bound = 1.0 / np.sqrt(fan_in)
        # torch layout (cout, cin, kh, kw)
        w = jax.random.uniform(kw, (cout, cin, ksz, ksz), jnp.float32, -bound, bound)
        b = jax.random.uniform(kb, (cout,), jnp.float32, -bound, bound)
        # matmul layout: (cout, 9*cin), column index = (kh*3 + kw)*cin + ci
        w_m = jnp.transpose(w, (0, 2, 3, 1)).reshape(cout, ksz * ksz * cin)
        return w_m, b

    k1, k2, k3 = jax.random.split(key, 3)
    w1, b1 = conv_init(k1, 8, 1)       # (8, 9)
    w2, b2 = conv_init(k2, 16, 8)      # (16, 72)
    w3, b3 = conv_init(k3, 1, 16)      # (1, 144)
    return (w1, b1, w2, b2, w3, b3)


# --------------------------------------------------------- pure-JAX reference
def reference_forward(params, exp_x, exp_y, coeff, node_x, node_y):
    w1, b1, w2, b2, w3, b3 = params
    X = node_x[None, :, None].astype(jnp.float32)
    Y = node_y[None, :, None].astype(jnp.float32)
    ex, ey, co = exp_x[:, None, :], exp_y[:, None, :], coeff[:, None, :]
    nodal = jnp.sum(co * (X ** ex) * (Y ** ey), axis=2)
    nodal = nodal / (jnp.max(nodal, axis=1, keepdims=True) + 1e-6)
    B = nodal.shape[0]
    s = int(round(np.sqrt(nodal.shape[1])))
    img = nodal.reshape(B, s, s, 1)

    def conv(x, w_m, b, cin, cout):
        xp = jnp.pad(x, ((0, 0), (1, 1), (1, 1), (0, 0)))
        acc = jnp.zeros(x.shape[:3] + (cout,), jnp.float32)
        for k in range(9):
            kh, kw_ = k // 3, k % 3
            patch = xp[:, kh:kh + s, kw_:kw_ + s, :]
            wk = w_m[:, k * cin:(k + 1) * cin]               # (cout, cin)
            acc = acc + jnp.einsum("bhwc,dc->bhwd", patch, wk,
                                   precision=lax.Precision.HIGHEST)
        return acc + b.reshape(1, 1, 1, cout)

    h1 = jnp.maximum(conv(img, w1, b1, 1, 8), 0.0)
    h2 = jnp.maximum(conv(h1, w2, b2, 8, 16), 0.0)
    z = conv(h2, w3, b3, 16, 1)
    out = jnp.where(z > 20.0, z, jnp.log1p(jnp.exp(jnp.minimum(z, 20.0))))
    return jnp.transpose(out, (0, 3, 1, 2))


# ------------------------------------------------------------------------ main
if __name__ == "__main__":
    key = jax.random.PRNGKey(0)
    B, T, s = 2, 8, 8          # batch, polynomial terms, grid size (N = s*s)
    N = s * s

    # square nodal grid on [0, 1] x [0, 1]
    lin = jnp.linspace(0.0, 1.0, s)
    gx, gy = jnp.meshgrid(lin, lin, indexing="ij")
    node_x = gx.reshape(-1).astype(jnp.float32)
    node_y = gy.reshape(-1).astype(jnp.float32)

    kx, ky, kc, kp = jax.random.split(key, 4)
    exp_x = jax.random.randint(kx, (B, T), 0, 4).astype(jnp.float32)
    exp_y = jax.random.randint(ky, (B, T), 0, 4).astype(jnp.float32)
    coeff = jax.random.normal(kc, (B, T), jnp.float32)

    params = init_params(kp)

    bb = _pick_bb(B, N)                      # bb=2 -> 128 pixels per block
    static_pack = _build_static_pack(params, node_x, node_y, B, s)
    w_pack = _build_weight_pack(params)

    out = cnn_forward(static_pack, w_pack, exp_x, exp_y, coeff, s=s, bb=bb)
    out = jax.block_until_ready(out)
    assert out.shape == (B, 1, s, s)

    ref = reference_forward(params, exp_x, exp_y, coeff, node_x, node_y)
    np.testing.assert_allclose(np.asarray(out), np.asarray(ref), rtol=1e-3, atol=1e-3)
    print("KERNEL_OK")
</pallas_src>

<mosaic_0001>
module attributes {stable_mosaic.version = 11 : i64} {
  func.func @kernel(%arg0: i32, %arg1: memref<38x128xf32, #tpu.memory_space<vmem>>, %arg2: memref<24x128xf32, #tpu.memory_space<vmem>>, %arg3: memref<32x144xf32, #tpu.memory_space<vmem>>, %arg4: memref<1x128xf32, #tpu.memory_space<vmem>>) attributes {dimension_semantics = [#tpu.dimension_semantics<parallel>], iteration_bounds = array<i64: 1>, scalar_prefetch = 0 : i64, scratch_operands = 0 : i64, tpu.core_type = #tpu.core_type<tc>, window_params = [{transform_indices = @transform_0, window_bounds = array<i64: 38, 128>}, {transform_indices = @transform_1, window_bounds = array<i64: 24, 128>}, {pipeline_mode = #tpu.pipeline_mode<synchronous>, transform_indices = @transform_2, window_bounds = array<i64: 32, 144>}, {transform_indices = @transform_3, window_bounds = array<i64: 1, 128>}]} {
    %c34 = arith.constant 34 : index
    %c0 = arith.constant 0 : index
    %0 = vector.load %arg1[%c34, %c0] : memref<38x128xf32, #tpu.memory_space<vmem>>, vector<1x128xf32>
    %c35 = arith.constant 35 : index
    %c0_0 = arith.constant 0 : index
    %1 = vector.load %arg1[%c35, %c0_0] : memref<38x128xf32, #tpu.memory_space<vmem>>, vector<1x128xf32>
    %c36 = arith.constant 36 : index
    %c0_1 = arith.constant 0 : index
    %2 = vector.load %arg1[%c36, %c0_1] : memref<38x128xf32, #tpu.memory_space<vmem>>, vector<1x128xf32>
    %c37 = arith.constant 37 : index
    %c0_2 = arith.constant 0 : index
    %3 = vector.load %arg1[%c37, %c0_2] : memref<38x128xf32, #tpu.memory_space<vmem>>, vector<1x128xf32>
    %c0_3 = arith.constant 0 : index
    %c0_4 = arith.constant 0 : index
    %4 = vector.load %arg2[%c0_3, %c0_4] : memref<24x128xf32, #tpu.memory_space<vmem>>, vector<8x128xf32>
    %c8 = arith.constant 8 : index
    %c0_5 = arith.constant 0 : index
    %5 = vector.load %arg2[%c8, %c0_5] : memref<24x128xf32, #tpu.memory_space<vmem>>, vector<8x128xf32>
    %c16 = arith.constant 16 : index
    %c0_6 = arith.constant 0 : index
    %6 = vector.load %arg2[%c16, %c0_6] : memref<24x128xf32, #tpu.memory_space<vmem>>, vector<8x128xf32>
    %7 = vector.broadcast %0 : vector<1x128xf32> to vector<8x128xf32>
    %8 = arith.mulf %4, %7 : vector<8x128xf32>
    %9 = vector.broadcast %1 : vector<1x128xf32> to vector<8x128xf32>
    %10 = arith.mulf %5, %9 : vector<8x128xf32>
    %11 = arith.addf %8, %10 : vector<8x128xf32>
    %12 = math.exp %11 : vector<8x128xf32>
    %cst = arith.constant 0.000000e+00 : f32
    %13 = vector.broadcast %cst : f32 to vector<1x128xf32>
    %14 = arith.cmpf ogt, %2, %13 : vector<1x128xf32>
    %cst_7 = arith.constant 0.000000e+00 : f32
    %15 = vector.broadcast %cst_7 : f32 to vector<8x128xf32>
    %16 = arith.cmpf ogt, %4, %15 : vector<8x128xf32>
    %17 = vector.broadcast %14 : vector<1x128xi1> to vector<8x128xi1>
    %18 = arith.andi %17, %16 : vector<8x128xi1>
    %cst_8 = arith.constant 0.000000e+00 : f32
    %19 = vector.broadcast %cst_8 : f32 to vector<1x128xf32>
    %20 = arith.cmpf ogt, %3, %19 : vector<1x128xf32>
    %cst_9 = arith.constant 0.000000e+00 : f32
    %21 = vector.broadcast %cst_9 : f32 to vector<8x128xf32>
    %22 = arith.cmpf ogt, %5, %21 : vector<8x128xf32>
    %23 = vector.broadcast %20 : vector<1x128xi1> to vector<8x128xi1>
    %24 = arith.andi %23, %22 : vector<8x128xi1>
    %25 = arith.ori %18, %24 : vector<8x128xi1>
    %cst_10 = arith.constant 0.000000e+00 : f32
    %cst_11 = arith.constant 1.000000e+00 : f32
    %26 = vector.broadcast %cst_10 : f32 to vector<8x128xf32>
    %27 = vector.broadcast %cst_11 : f32 to vector<8x128xf32>
    %28 = arith.select %25, %26, %27 : vector<8x128xi1>, vector<8x128xf32>
    %29 = arith.mulf %6, %12 : vector<8x128xf32>
    %30 = arith.mulf %29, %28 : vector<8x128xf32>
    %cst_12 = arith.constant dense<0.000000e+00> : vector<128xf32>
    %31 = vector.multi_reduction <add>, %30, %cst_12 [0] : vector<8x128xf32> to vector<128xf32>
    %32 = vector.shape_cast %31 : vector<128xf32> to vector<1x128xf32>
    %33 = tpu.iota {dimensions = array<i32: 1>} : vector<1x128xi32>
    %cst_13 = arith.constant 0.000000e+00 : f32
    %34 = vector.broadcast %cst_13 : f32 to vector<1x128xf32>
    %c0_i32 = arith.constant 0 : i32
    %35 = vector.broadcast %c0_i32 : i32 to vector<1x128xi32>
    %36 = arith.cmpi sge, %33, %35 : vector<1x128xi32>
    %c64_i32 = arith.constant 64 : i32
    %37 = vector.broadcast %c64_i32 : i32 to vector<1x128xi32>
    %38 = arith.cmpi slt, %33, %37 : vector<1x128xi32>
    %39 = arith.andi %36, %38 : vector<1x128xi1>
    %cst_14 = arith.constant 0xFF800000 : f32
    %40 = vector.broadcast %cst_14 : f32 to vector<1x128xf32>
    %41 = arith.select %39, %32, %40 : vector<1x128xi1>, vector<1x128xf32>
    %cst_15 = arith.constant dense<0xFF800000> : vector<1xf32>
    %42 = vector.multi_reduction <maximumf>, %41, %cst_15 [1] : vector<1x128xf32> to vector<1xf32>
    %43 = vector.shape_cast %42 : vector<1xf32> to vector<1x1xf32>
    %cst_16 = arith.constant 9.99999997E-7 : f32
    %44 = vector.broadcast %cst_16 : f32 to vector<1x1xf32>
    %45 = arith.addf %43, %44 : vector<1x1xf32>
    %cst_17 = arith.constant 0.000000e+00 : f32
    %46 = vector.shape_cast %45 : vector<1x1xf32> to vector<1x1xf32>
    %47 = vector.broadcast %46 : vector<1x1xf32> to vector<1x128xf32>
    %48 = vector.broadcast %cst_17 : f32 to vector<1x128xf32>
    %49 = arith.select %39, %47, %48 : vector<1x128xi1>, vector<1x128xf32>
    %50 = arith.addf %34, %49 : vector<1x128xf32>
    %c64_i32_18 = arith.constant 64 : i32
    %51 = vector.broadcast %c64_i32_18 : i32 to vector<1x128xi32>
    %52 = arith.cmpi sge, %33, %51 : vector<1x128xi32>
    %c128_i32 = arith.constant 128 : i32
    %53 = vector.broadcast %c128_i32 : i32 to vector<1x128xi32>
    %54 = arith.cmpi slt, %33, %53 : vector<1x128xi32>
    %55 = arith.andi %52, %54 : vector<1x128xi1>
    %cst_19 = arith.constant 0xFF800000 : f32
    %56 = vector.broadcast %cst_19 : f32 to vector<1x128xf32>
    %57 = arith.select %55, %32, %56 : vector<1x128xi1>, vector<1x128xf32>
    %cst_20 = arith.constant dense<0xFF800000> : vector<1xf32>
    %58 = vector.multi_reduction <maximumf>, %57, %cst_20 [1] : vector<1x128xf32> to vector<1xf32>
    %59 = vector.shape_cast %58 : vector<1xf32> to vector<1x1xf32>
    %cst_21 = arith.constant 9.99999997E-7 : f32
    %60 = vector.broadcast %cst_21 : f32 to vector<1x1xf32>
    %61 = arith.addf %59, %60 : vector<1x1xf32>
    %cst_22 = arith.constant 0.000000e+00 : f32
    %62 = vector.shape_cast %61 : vector<1x1xf32> to vector<1x1xf32>
    %63 = vector.broadcast %62 : vector<1x1xf32> to vector<1x128xf32>
    %64 = vector.broadcast %cst_22 : f32 to vector<1x128xf32>
    %65 = arith.select %55, %63, %64 : vector<1x128xi1>, vector<1x128xf32>
    %66 = arith.addf %50, %65 : vector<1x128xf32>
    %67 = arith.divf %32, %66 : vector<1x128xf32>
    %c25 = arith.constant 25 : index
    %c0_23 = arith.constant 0 : index
    %68 = vector.load %arg1[%c25, %c0_23] : memref<38x128xf32, #tpu.memory_space<vmem>>, vector<9x128xf32>
    %c0_24 = arith.constant 0 : index
    %c0_25 = arith.constant 0 : index
    %69 = vector.load %arg1[%c0_24, %c0_25] : memref<38x128xf32, #tpu.memory_space<vmem>>, vector<8x128xf32>
    %c8_26 = arith.constant 8 : index
    %c0_27 = arith.constant 0 : index
    %70 = vector.load %arg1[%c8_26, %c0_27] : memref<38x128xf32, #tpu.memory_space<vmem>>, vector<16x128xf32>
    %c24 = arith.constant 24 : index
    %c0_28 = arith.constant 0 : index
    %71 = vector.load %arg1[%c24, %c0_28] : memref<38x128xf32, #tpu.memory_space<vmem>>, vector<1x128xf32>
    %c0_29 = arith.constant 0 : index
    %c0_30 = arith.constant 0 : index
    %72 = vector.load %arg3[%c0_29, %c0_30] : memref<32x144xf32, #tpu.memory_space<vmem>>, vector<8x9xf32>
    %c8_31 = arith.constant 8 : index
    %c0_32 = arith.constant 0 : index
    %73 = vector.load %arg3[%c8_31, %c0_32] : memref<32x144xf32, #tpu.memory_space<vmem>>, vector<16x72xf32>
    %c24_33 = arith.constant 24 : index
    %c0_34 = arith.constant 0 : index
    %74 = vector.load %arg3[%c24_33, %c0_34] : memref<32x144xf32, #tpu.memory_space<vmem>>, vector<8x144xf32>
    %c9_i32 = arith.constant 9 : i32
    %75 = tpu.dynamic_rotate %67 by %c9_i32 dim 1 : vector<1x128xf32>, i32 -> vector<1x128xf32>
    %76 = vector.extract_strided_slice %68 {offsets = [0, 0], sizes = [1, 128], strides = [1, 1]} : vector<9x128xf32> to vector<1x128xf32>
    %77 = arith.mulf %75, %76 : vector<1x128xf32>
    %c8_i32 = arith.constant 8 : i32
    %78 = tpu.dynamic_rotate %67 by %c8_i32 dim 1 : vector<1x128xf32>, i32 -> vector<1x128xf32>
    %79 = vector.extract_strided_slice %68 {offsets = [1, 0], sizes = [1, 128], strides = [1, 1]} : vector<9x128xf32> to vector<1x128xf32>
    %80 = arith.mulf %78, %79 : vector<1x128xf32>
    %c7_i32 = arith.constant 7 : i32
    %81 = tpu.dynamic_rotate %67 by %c7_i32 dim 1 : vector<1x128xf32>, i32 -> vector<1x128xf32>
    %82 = vector.extract_strided_slice %68 {offsets = [2, 0], sizes = [1, 128], strides = [1, 1]} : vector<9x128xf32> to vector<1x128xf32>
    %83 = arith.mulf %81, %82 : vector<1x128xf32>
    %c1_i32 = arith.constant 1 : i32
    %84 = tpu.dynamic_rotate %67 by %c1_i32 dim 1 : vector<1x128xf32>, i32 -> vector<1x128xf32>
    %85 = vector.extract_strided_slice %68 {offsets = [3, 0], sizes = [1, 128], strides = [1, 1]} : vector<9x128xf32> to vector<1x128xf32>
    %86 = arith.mulf %84, %85 : vector<1x128xf32>
    %c127_i32 = arith.constant 127 : i32
    %87 = tpu.dynamic_rotate %67 by %c127_i32 dim 1 : vector<1x128xf32>, i32 -> vector<1x128xf32>
    %88 = vector.extract_strided_slice %68 {offsets = [5, 0], sizes = [1, 128], strides = [1, 1]} : vector<9x128xf32> to vector<1x128xf32>
    %89 = arith.mulf %87, %88 : vector<1x128xf32>
    %c121_i32 = arith.constant 121 : i32
    %90 = tpu.dynamic_rotate %67 by %c121_i32 dim 1 : vector<1x128xf32>, i32 -> vector<1x128xf32>
    %91 = vector.extract_strided_slice %68 {offsets = [6, 0], sizes = [1, 128], strides = [1, 1]} : vector<9x128xf32> to vector<1x128xf32>
    %92 = arith.mulf %90, %91 : vector<1x128xf32>
    %c120_i32 = arith.constant 120 : i32
    %93 = tpu.dynamic_rotate %67 by %c120_i32 dim 1 : vector<1x128xf32>, i32 -> vector<1x128xf32>
    %94 = vector.extract_strided_slice %68 {offsets = [7, 0], sizes = [1, 128], strides = [1, 1]} : vector<9x128xf32> to vector<1x128xf32>
    %95 = arith.mulf %93, %94 : vector<1x128xf32>
    %c119_i32 = arith.constant 119 : i32
    %96 = tpu.dynamic_rotate %67 by %c119_i32 dim 1 : vector<1x128xf32>, i32 -> vector<1x128xf32>
    %97 = vector.extract_strided_slice %68 {offsets = [8, 0], sizes = [1, 128], strides = [1, 1]} : vector<9x128xf32> to vector<1x128xf32>
    %98 = arith.mulf %96, %97 : vector<1x128xf32>
    %99 = tpu.concatenate %77, %80, %83, %86, %67, %89, %92, %95, %98 in 0 : vector<1x128xf32>, vector<1x128xf32>, vector<1x128xf32>, vector<1x128xf32>, vector<1x128xf32>, vector<1x128xf32>, vector<1x128xf32>, vector<1x128xf32>, vector<1x128xf32> -> vector<9x128xf32>
    %cst_35 = arith.constant dense<0.000000e+00> : vector<8x128xf32>
    %100 = tpu.matmul %72, %99, %cst_35 {dimension_numbers = #tpu.dot_dimension_numbers<[1], [0], [0], [1], [0, 0, 1, 1], [], []>} : vector<8x9xf32>, vector<9x128xf32>, vector<8x128xf32> -> vector<8x128xf32>
    %101 = arith.addf %100, %69 : vector<8x128xf32>
    %cst_36 = arith.constant 0.000000e+00 : f32
    %102 = vector.broadcast %cst_36 : f32 to vector<8x128xf32>
    %103 = arith.maximumf %101, %102 : vector<8x128xf32>
    %c9_i32_37 = arith.constant 9 : i32
    %104 = tpu.dynamic_rotate %103 by %c9_i32_37 dim 1 : vector<8x128xf32>, i32 -> vector<8x128xf32>
    %105 = vector.extract_strided_slice %68 {offsets = [0, 0], sizes = [1, 128], strides = [1, 1]} : vector<9x128xf32> to vector<1x128xf32>
    %106 = vector.broadcast %105 : vector<1x128xf32> to vector<8x128xf32>
    %107 = arith.mulf %104, %106 : vector<8x128xf32>
    %c8_i32_38 = arith.constant 8 : i32
    %108 = tpu.dynamic_rotate %103 by %c8_i32_38 dim 1 : vector<8x128xf32>, i32 -> vector<8x128xf32>
    %109 = vector.extract_strided_slice %68 {offsets = [1, 0], sizes = [1, 128], strides = [1, 1]} : vector<9x128xf32> to vector<1x128xf32>
    %110 = vector.broadcast %109 : vector<1x128xf32> to vector<8x128xf32>
    %111 = arith.mulf %108, %110 : vector<8x128xf32>
    %c7_i32_39 = arith.constant 7 : i32
    %112 = tpu.dynamic_rotate %103 by %c7_i32_39 dim 1 : vector<8x128xf32>, i32 -> vector<8x128xf32>
    %113 = vector.extract_strided_slice %68 {offsets = [2, 0], sizes = [1, 128], strides = [1, 1]} : vector<9x128xf32> to vector<1x128xf32>
    %114 = vector.broadcast %113 : vector<1x128xf32> to vector<8x128xf32>
    %115 = arith.mulf %112, %114 : vector<8x128xf32>
    %c1_i32_40 = arith.constant 1 : i32
    %116 = tpu.dynamic_rotate %103 by %c1_i32_40 dim 1 : vector<8x128xf32>, i32 -> vector<8x128xf32>
    %117 = vector.extract_strided_slice %68 {offsets = [3, 0], sizes = [1, 128], strides = [1, 1]} : vector<9x128xf32> to vector<1x128xf32>
    %118 = vector.broadcast %117 : vector<1x128xf32> to vector<8x128xf32>
    %119 = arith.mulf %116, %118 : vector<8x128xf32>
    %c127_i32_41 = arith.constant 127 : i32
    %120 = tpu.dynamic_rotate %103 by %c127_i32_41 dim 1 : vector<8x128xf32>, i32 -> vector<8x128xf32>
    %121 = vector.extract_strided_slice %68 {offsets = [5, 0], sizes = [1, 128], strides = [1, 1]} : vector<9x128xf32> to vector<1x128xf32>
    %122 = vector.broadcast %121 : vector<1x128xf32> to vector<8x128xf32>
    %123 = arith.mulf %120, %122 : vector<8x128xf32>
    %c121_i32_42 = arith.constant 121 : i32
    %124 = tpu.dynamic_rotate %103 by %c121_i32_42 dim 1 : vector<8x128xf32>, i32 -> vector<8x128xf32>
    %125 = vector.extract_strided_slice %68 {offsets = [6, 0], sizes = [1, 128], strides = [1, 1]} : vector<9x128xf32> to vector<1x128xf32>
    %126 = vector.broadcast %125 : vector<1x128xf32> to vector<8x128xf32>
    %127 = arith.mulf %124, %126 : vector<8x128xf32>
    %c120_i32_43 = arith.constant 120 : i32
    %128 = tpu.dynamic_rotate %103 by %c120_i32_43 dim 1 : vector<8x128xf32>, i32 -> vector<8x128xf32>
    %129 = vector.extract_strided_slice %68 {offsets = [7, 0], sizes = [1, 128], strides = [1, 1]} : vector<9x128xf32> to vector<1x128xf32>
    %130 = vector.broadcast %129 : vector<1x128xf32> to vector<8x128xf32>
    %131 = arith.mulf %128, %130 : vector<8x128xf32>
    %c119_i32_44 = arith.constant 119 : i32
    %132 = tpu.dynamic_rotate %103 by %c119_i32_44 dim 1 : vector<8x128xf32>, i32 -> vector<8x128xf32>
    %133 = vector.extract_strided_slice %68 {offsets = [8, 0], sizes = [1, 128], strides = [1, 1]} : vector<9x128xf32> to vector<1x128xf32>
    %134 = vector.broadcast %133 : vector<1x128xf32> to vector<8x128xf32>
    %135 = arith.mulf %132, %134 : vector<8x128xf32>
    %136 = tpu.concatenate %107, %111, %115, %119, %103, %123, %127, %131, %135 in 0 : vector<8x128xf32>, vector<8x128xf32>, vector<8x128xf32>, vector<8x128xf32>, vector<8x128xf32>, vector<8x128xf32>, vector<8x128xf32>, vector<8x128xf32>, vector<8x128xf32> -> vector<72x128xf32>
    %cst_45 = arith.constant dense<0.000000e+00> : vector<16x128xf32>
    %137 = tpu.matmul %73, %136, %cst_45 {dimension_numbers = #tpu.dot_dimension_numbers<[1], [0], [0], [1], [0, 0, 1, 1], [], []>} : vector<16x72xf32>, vector<72x128xf32>, vector<16x128xf32> -> vector<16x128xf32>
    %138 = arith.addf %137, %70 : vector<16x128xf32>
    %cst_46 = arith.constant 0.000000e+00 : f32
    %139 = vector.broadcast %cst_46 : f32 to vector<16x128xf32>
    %140 = arith.maximumf %138, %139 : vector<16x128xf32>
    %c9_i32_47 = arith.constant 9 : i32
    %141 = tpu.dynamic_rotate %140 by %c9_i32_47 dim 1 : vector<16x128xf32>, i32 -> vector<16x128xf32>
    %142 = vector.extract_strided_slice %68 {offsets = [0, 0], sizes = [1, 128], strides = [1, 1]} : vector<9x128xf32> to vector<1x128xf32>
    %143 = vector.broadcast %142 : vector<1x128xf32> to vector<16x128xf32>
    %144 = arith.mulf %141, %143 : vector<16x128xf32>
    %c8_i32_48 = arith.constant 8 : i32
    %145 = tpu.dynamic_rotate %140 by %c8_i32_48 dim 1 : vector<16x128xf32>, i32 -> vector<16x128xf32>
    %146 = vector.extract_strided_slice %68 {offsets = [1, 0], sizes = [1, 128], strides = [1, 1]} : vector<9x128xf32> to vector<1x128xf32>
    %147 = vector.broadcast %146 : vector<1x128xf32> to vector<16x128xf32>
    %148 = arith.mulf %145, %147 : vector<16x128xf32>
    %c7_i32_49 = arith.constant 7 : i32
    %149 = tpu.dynamic_rotate %140 by %c7_i32_49 dim 1 : vector<16x128xf32>, i32 -> vector<16x128xf32>
    %150 = vector.extract_strided_slice %68 {offsets = [2, 0], sizes = [1, 128], strides = [1, 1]} : vector<9x128xf32> to vector<1x128xf32>
    %151 = vector.broadcast %150 : vector<1x128xf32> to vector<16x128xf32>
    %152 = arith.mulf %149, %151 : vector<16x128xf32>
    %c1_i32_50 = arith.constant 1 : i32
    %153 = tpu.dynamic_rotate %140 by %c1_i32_50 dim 1 : vector<16x128xf32>, i32 -> vector<16x128xf32>
    %154 = vector.extract_strided_slice %68 {offsets = [3, 0], sizes = [1, 128], strides = [1, 1]} : vector<9x128xf32> to vector<1x128xf32>
    %155 = vector.broadcast %154 : vector<1x128xf32> to vector<16x128xf32>
    %156 = arith.mulf %153, %155 : vector<16x128xf32>
    %c127_i32_51 = arith.constant 127 : i32
    %157 = tpu.dynamic_rotate %140 by %c127_i32_51 dim 1 : vector<16x128xf32>, i32 -> vector<16x128xf32>
    %158 = vector.extract_strided_slice %68 {offsets = [5, 0], sizes = [1, 128], strides = [1, 1]} : vector<9x128xf32> to vector<1x128xf32>
    %159 = vector.broadcast %158 : vector<1x128xf32> to vector<16x128xf32>
    %160 = arith.mulf %157, %159 : vector<16x128xf32>
    %c121_i32_52 = arith.constant 121 : i32
    %161 = tpu.dynamic_rotate %140 by %c121_i32_52 dim 1 : vector<16x128xf32>, i32 -> vector<16x128xf32>
    %162 = vector.extract_strided_slice %68 {offsets = [6, 0], sizes = [1, 128], strides = [1, 1]} : vector<9x128xf32> to vector<1x128xf32>
    %163 = vector.broadcast %162 : vector<1x128xf32> to vector<16x128xf32>
    %164 = arith.mulf %161, %163 : vector<16x128xf32>
    %c120_i32_53 = arith.constant 120 : i32
    %165 = tpu.dynamic_rotate %140 by %c120_i32_53 dim 1 : vector<16x128xf32>, i32 -> vector<16x128xf32>
    %166 = vector.extract_strided_slice %68 {offsets = [7, 0], sizes = [1, 128], strides = [1, 1]} : vector<9x128xf32> to vector<1x128xf32>
    %167 = vector.broadcast %166 : vector<1x128xf32> to vector<16x128xf32>
    %168 = arith.mulf %165, %167 : vector<16x128xf32>
    %c119_i32_54 = arith.constant 119 : i32
    %169 = tpu.dynamic_rotate %140 by %c119_i32_54 dim 1 : vector<16x128xf32>, i32 -> vector<16x128xf32>
    %170 = vector.extract_strided_slice %68 {offsets = [8, 0], sizes = [1, 128], strides = [1, 1]} : vector<9x128xf32> to vector<1x128xf32>
    %171 = vector.broadcast %170 : vector<1x128xf32> to vector<16x128xf32>
    %172 = arith.mulf %169, %171 : vector<16x128xf32>
    %173 = tpu.concatenate %144, %148, %152, %156, %140, %160, %164, %168, %172 in 0 : vector<16x128xf32>, vector<16x128xf32>, vector<16x128xf32>, vector<16x128xf32>, vector<16x128xf32>, vector<16x128xf32>, vector<16x128xf32>, vector<16x128xf32>, vector<16x128xf32> -> vector<144x128xf32>
    %cst_55 = arith.constant dense<0.000000e+00> : vector<8x128xf32>
    %174 = tpu.matmul %74, %173, %cst_55 {dimension_numbers = #tpu.dot_dimension_numbers<[1], [0], [0], [1], [0, 0, 1, 1], [], []>} : vector<8x144xf32>, vector<144x128xf32>, vector<8x128xf32> -> vector<8x128xf32>
    %175 = vector.extract_strided_slice %174 {offsets = [0, 0], sizes = [1, 128], strides = [1, 1]} : vector<8x128xf32> to vector<1x128xf32>
    %176 = arith.addf %175, %71 : vector<1x128xf32>
    %cst_56 = arith.constant 2.000000e+01 : f32
    %177 = vector.broadcast %cst_56 : f32 to vector<1x128xf32>
    %178 = arith.cmpf ogt, %176, %177 : vector<1x128xf32>
    %cst_57 = arith.constant 2.000000e+01 : f32
    %179 = vector.broadcast %cst_57 : f32 to vector<1x128xf32>
    %180 = arith.minimumf %176, %179 : vector<1x128xf32>
    %181 = math.exp %180 : vector<1x128xf32>
    %cst_58 = arith.constant 1.000000e+00 : f32
    %182 = vector.broadcast %cst_58 : f32 to vector<1x128xf32>
    %183 = arith.addf %182, %181 : vector<1x128xf32>
    %184 = math.log %183 : vector<1x128xf32>
    %185 = arith.select %178, %176, %184 : vector<1x128xi1>, vector<1x128xf32>
    %c0_59 = arith.constant 0 : index
    %c0_60 = arith.constant 0 : index
    %186 = vector.load %arg4[%c0_59, %c0_60] : memref<1x128xf32, #tpu.memory_space<vmem>>, vector<1x128xf32>
    tpu.vector_store %arg4[%c0_59, %c0_60], %185 {strides = array<i32>} : memref<1x128xf32, #tpu.memory_space<vmem>>, vector<1x128xf32>,
    return
  }
  func.func @transform_0(%arg0: i32) -> (i32, i32) {
    %c0_i32 = arith.constant 0 : i32
    %c0_i32_0 = arith.constant 0 : i32
    return %c0_i32, %arg0 : i32, i32
  }
  func.func @transform_1(%arg0: i32) -> (i32, i32) {
    %c0_i32 = arith.constant 0 : i32
    %c0_i32_0 = arith.constant 0 : i32
    return %c0_i32, %arg0 : i32, i32
  }
  func.func @transform_2(%arg0: i32) -> (i32, i32) {
    %c0_i32 = arith.constant 0 : i32
    %c0_i32_0 = arith.constant 0 : i32
    %c0_i32_1 = arith.constant 0 : i32
    return %c0_i32, %c0_i32_0 : i32, i32
  }
  func.func @transform_3(%arg0: i32) -> (i32, i32) {
    %c0_i32 = arith.constant 0 : i32
    %c0_i32_0 = arith.constant 0 : i32
    return %c0_i32, %arg0 : i32, i32
  }
}

</mosaic_0001>

<llo_original>
// kernel: tpu_custom_call.1
$region0: #{tpu_custom_call.1}
  #allocation0 [shape = 'u32[]', space=smem, size = 0x4, offset = 0x4, fixed_abs, tag = 'smem constant byte address 0x4 - core index']
  #allocation1 [shape = 'u32[144,128]{1,0:T(1,128)}', space=vmem, size = 0x12000, scoped, tag = 'internal scratch']
  %s0 = inlined_call_operand.hbm [shape: f32[38,128], index: 0, kind: input, shape index: {}]
  %s1 = inlined_call_operand.hbm [shape: f32[24,128], index: 1, kind: input, shape index: {}]
  %s2 = inlined_call_operand.hbm [shape: f32[32,144], index: 2, kind: input, shape index: {}]
  %s3 = inlined_call_operand.hbm [shape: f32[1,128], index: 3, kind: output, shape index: {}]
  %s4 = sld [smem:[#allocation0]]
  $region34: #{tpu_custom_call.1} parent=0
    _
  %s6 = ssub.s32 1, %s4
  %s7 = scalar_select 0, %s6, %s4
  $region1: #{tpu_custom_call.1} parent=0
    #allocation2 [shape = 'u8[20480]{0}', space=vmem, size = 0x5000, scoped, tag = 'input window, operand 0, single buffered']
    #allocation3 [shape = 's32[1]{0}', space=sflag, size = 0x4, scoped, tag = 'scoped memory for tpu_custom_call.1']
    #allocation4 [shape = 's32[1]{0}', space=sflag, size = 0x4, scoped, tag = 'scoped memory for tpu_custom_call.1']
    #allocation5 [shape = 'u8[12288]{0}', space=vmem, size = 0x3000, scoped, tag = 'input window, operand 1, single buffered']
    #allocation6 [shape = 's32[1]{0}', space=sflag, size = 0x4, scoped, tag = 'scoped memory for tpu_custom_call.1']
    #allocation7 [shape = 'u8[32768]{0}', space=vmem, size = 0x8000, scoped, tag = 'input window, operand 2, single buffered']
    #allocation8 [shape = 'u8[512]{0}', space=vmem, size = 0x400, scoped, tag = 'output window, operand 0, single buffered']
    %8 = vsyncpa [#allocation3], 0
    %9 = vsyncpa [#allocation6], 0
    %10 = vsyncpa [#allocation4], 0
    // Predicated region
    $region2: #{tpu_custom_call.1} parent=1 // pred_check
      _
    $region3: #{tpu_custom_call.1} parent=1 // pred_check_branch
      %12 = sbr.rel (0) target = $region5
    $region4: #{tpu_custom_call.1} parent=1 // pred_region
      %s14 = ssub.s32 640, 640
      %15 = vsyncadd [#allocation3], %s14
      %s16 = sshll.u32 [#allocation2], 4
      %s17 = int_to_ptr.vmem [resolvable:$true] %s16
      %22 = dma.hbm_to_vmem [thread:$0]  %s0, 640, %s17, [#allocation3], 128, 128, 8
    $region5: #{tpu_custom_call.1} parent=1 // pred_fallthru
      _
    // Predicated region
    $region6: #{tpu_custom_call.1} parent=1 // pred_check
      _
    $region7: #{tpu_custom_call.1} parent=1 // pred_check_branch
      %24 = sbr.rel (0) target = $region9
    $region8: #{tpu_custom_call.1} parent=1 // pred_region
      %s26 = ssub.s32 384, 384
      %27 = vsyncadd [#allocation6], %s26
      %s28 = sshll.u32 [#allocation5], 4
      %s29 = int_to_ptr.vmem [resolvable:$true] %s28
      %34 = dma.hbm_to_vmem [thread:$0]  %s1, 384, %s29, [#allocation6], 128, 128, 8
    $region9: #{tpu_custom_call.1} parent=1 // pred_fallthru
      _
    // Predicated region
    $region10: #{tpu_custom_call.1} parent=1 // pred_check
      _
    $region11: #{tpu_custom_call.1} parent=1 // pred_check_branch
      %36 = sbr.rel (0) target = $region13
    $region12: #{tpu_custom_call.1} parent=1 // pred_region
      %s38 = ssub.s32 1024, 1024
      %39 = vsyncadd [#allocation6], %s38
      %s40 = sshll.u32 [#allocation7], 4
      %s41 = int_to_ptr.vmem [resolvable:$true] %s40
      %46 = dma.hbm_to_vmem [thread:$0]  %s2, 1024, %s41, [#allocation6], 256, 256, 16
    $region13: #{tpu_custom_call.1} parent=1 // pred_fallthru
      _
    // Predicated region
    $region14: #{tpu_custom_call.1} parent=1 // pred_check
      _
    $region15: #{tpu_custom_call.1} parent=1 // pred_check_branch
      %48 = sbr.rel (0) target = $region17
    $region16: #{tpu_custom_call.1} parent=1 // pred_region
      %49 = dma.done [#allocation3], 640
    $region17: #{tpu_custom_call.1} parent=1 // pred_fallthru
      _
    // Predicated region
    $region18: #{tpu_custom_call.1} parent=1 // pred_check
      _
    $region19: #{tpu_custom_call.1} parent=1 // pred_check_branch
      %51 = sbr.rel (0) target = $region21
    $region20: #{tpu_custom_call.1} parent=1 // pred_region
      %52 = dma.done [#allocation6], 384
    $region21: #{tpu_custom_call.1} parent=1 // pred_fallthru
      _
    // Predicated region
    $region22: #{tpu_custom_call.1} parent=1 // pred_check
      _
    $region23: #{tpu_custom_call.1} parent=1 // pred_check_branch
      %54 = sbr.rel (0) target = $region25
    $region24: #{tpu_custom_call.1} parent=1 // pred_region
      %55 = dma.done [#allocation6], 1024
    $region25: #{tpu_custom_call.1} parent=1 // pred_fallthru
      _
    %v56 = vld [vmem:[#allocation2 + $0x22] sm:$0x1]
    %v57 = vld [vmem:[#allocation2 + $0x23] sm:$0x1]
    %v58 = vld [vmem:[#allocation2 + $0x24] sm:$0x1]
    %v59 = vld [vmem:[#allocation2 + $0x25] sm:$0x1]
    %v60 = vld [vmem:[#allocation5] sm:$0xff]
    %v61 = vld [vmem:[#allocation5 + $0x8] sm:$0xff]
    %v62 = vld [vmem:[#allocation5 + $0x10] sm:$0xff]
    %v63 = vlaneseq
    %v64 = vshrl.u32 %v63, 7
    %v65 = vsub.s32 0, %v64
    %v66 = vrot.slane %v56, %v65
    %v67 = vmul.f32 %v60, %v66
    %v68 = vlaneseq
    %v69 = vshrl.u32 %v68, 7
    %v70 = vsub.s32 0, %v69
    %v71 = vrot.slane %v57, %v70
    %v72 = vmul.f32 %v61, %v71
    %v73 = vadd.f32 %v67, %v72
    %v74 = vmul.f32 %v73, 1.442695
    %v75 = vpow.pop %v74
    %vm76 = vcmp.gt.f32.partialorder %v58, 0.0
    %vm77 = vcmp.gt.f32.partialorder %v60, 0.0
    %v78 = vsel %vm76, 1, 0
    %v79 = vlaneseq
    %v80 = vshrl.u32 %v79, 7
    %v81 = vsub.s32 0, %v80
    %v82 = vrot.slane %v78, %v81
    %vm83 = vcmp.eq.s32.totalorder %v82, 1
    %vm84 = vmand %vm83, %vm77
    %vm85 = vcmp.gt.f32.partialorder %v59, 0.0
    %vm86 = vcmp.gt.f32.partialorder %v61, 0.0
    %v87 = vsel %vm85, 1, 0
    %v88 = vlaneseq
    %v89 = vshrl.u32 %v88, 7
    %v90 = vsub.s32 0, %v89
    %v91 = vrot.slane %v87, %v90
    %vm92 = vcmp.eq.s32.totalorder %v91, 1
    %vm93 = vmand %vm92, %vm86
    %vm94 = vmor %vm84, %vm93
    %v95 = vsel %vm94, 0.0, 1.0
    %v96 = vmul.f32 %v62, %v75
    %v97 = vmul.f32 %v96, %v95
    %v98 = vrot.slane %v97, 4
    %v99 = vadd.f32 %v97, %v98
    %v100 = vrot.slane %v99, 2
    %v101 = vadd.f32 %v99, %v100
    %v102 = vrot.slane %v101, 1
    %v103 = vadd.f32 %v101, %v102
    %v104 = vlaneseq
    %v105 = vand.u32 %v104, 127
    %vm106 = vcmp.ge.s32.totalorder %v105, 0
    %vm107 = vcmp.lt.s32.totalorder %v105, 64
    %vm108 = vmand %vm106, %vm107
    %v109 = vsel %vm108, %v103, -inf
    %110 = vmax.xlane.f32.xlu0 %v109
    %v111 = vpop.xlane.xlu0 %110
    %v112 = vadd.f32 %v111, 1e-06
    %v113 = vsel %vm108, %v112, 0.0
    %v114 = vadd.f32 %v113, 0.0
    %vm115 = vcmp.ge.s32.totalorder %v105, 64
    %vm116 = vcmp.lt.s32.totalorder %v105, 128
    %vm117 = vmand %vm115, %vm116
    %v118 = vsel %vm117, %v103, -inf
    %119 = vmax.xlane.f32.xlu0 %v118
    %v120 = vpop.xlane.xlu0 %119
    %v121 = vadd.f32 %v120, 1e-06
    %v122 = vsel %vm117, %v121, 0.0
    %v123 = vadd.f32 %v114, %v122
    %v124 = vrcp.pop %v123
    %v125 = vmul.f32 %v103, %v124
    %v126 = vld [vmem:[#allocation2 + $0x19] sm:$0xff]
    %v127 = vld [vmem:[#allocation2 + $0x21] sm:$0x1]
    %v128 = vld [vmem:[#allocation2] sm:$0xff]
    %v129 = vld [vmem:[#allocation2 + $0x8] sm:$0xff]
    %v130 = vld [vmem:[#allocation2 + $0x10] sm:$0xff]
    %v131 = vld [vmem:[#allocation2 + $0x18] sm:$0x1]
    %v132 = vld [vmem:[#allocation7] sm:$0xff]
    %v133 = vld [vmem:[#allocation7 + $0x10] sm:$0xff]
    %v134 = vld [vmem:[#allocation7 + $0x20] sm:$0xff]
    %v135 = vld [vmem:[#allocation7 + $0x30] sm:$0xff]
    %v136 = vld [vmem:[#allocation7 + $0x38] sm:$0xff]
    %137 = vrot.lane.b32.xlu0 %v125, 9
    %v138 = vpop.permute.xlu0 %137
    %v139 = vmul.f32 %v138, %v126
    %140 = vrot.lane.b32.xlu0 %v125, 8
    %v141 = vpop.permute.xlu0 %140
    %v143 = vrot.slane %v126, 1
    %v145 = vmul.f32 %v141, %v143
    %146 = vrot.lane.b32.xlu0 %v125, 7
    %v147 = vpop.permute.xlu0 %146
    %v148 = vrot.slane %v126, 2
    %v150 = vmul.f32 %v147, %v148
    %151 = vrot.lane.b32.xlu0 %v125, 1
    %v152 = vpop.permute.xlu0 %151
    %v153 = vrot.slane %v126, 3
    %v155 = vmul.f32 %v152, %v153
    %156 = vrot.lane.b32.xlu0 %v125, 127
    %v157 = vpop.permute.xlu0 %156
    %v158 = vrot.slane %v126, 5
    %v160 = vmul.f32 %v157, %v158
    %161 = vrot.lane.b32.xlu0 %v125, 121
    %v162 = vpop.permute.xlu0 %161
    %v163 = vrot.slane %v126, 6
    %v165 = vmul.f32 %v162, %v163
    %166 = vrot.lane.b32.xlu0 %v125, 120
    %v167 = vpop.permute.xlu0 %166
    %v168 = vrot.slane %v126, 7
    %v170 = vmul.f32 %v167, %v168
    %171 = vrot.lane.b32.xlu0 %v125, 119
    %v172 = vpop.permute.xlu0 %171
    %v173 = vmul.f32 %v172, %v127
    %v175 = vrot.slane %v145, 7
    %v178 = vrot.slane %v150, 6
    %v181 = vrot.slane %v155, 5
    %v184 = vrot.slane %v160, 3
    %v187 = vrot.slane %v165, 2
    %v190 = vrot.slane %v170, 1
    %vm192 = vcmask 1040384
    %v193 = vsel %vm192, %v139, %v175
    %vm194 = vcmask 1041408
    %v195 = vsel %vm194, %v193, %v178
    %vm196 = vcmask 1042432
    %v197 = vsel %vm196, %v195, %v181
    %vm198 = vcmask 1043456
    %v199 = vsel %vm198, %v197, %v125
    %vm200 = vcmask 1044480
    %v201 = vsel %vm200, %v199, %v184
    %vm202 = vcmask 1045504
    %v203 = vsel %vm202, %v201, %v187
    %vm204 = vcmask 1046528
    %v205 = vsel %vm204, %v203, %v190
    %vm206 = vcmask 72704
    %v208 = vsel %vm206, %v132, 0
    %v211 = vsel %vm192, %v173, 0
    %213 = vmatprep.subr.mxu0 0.0
    %214 = vmatpush1.msra.mxu0 %v205
    %215 = vmatprep.subr.mxu0 0.0
    %216 = vmatpush1.msra.mxu0 %v211
    %217 = vmatprep.subr.mxu0 0.0
    %218 = vmatpush1.msra.mxu0 0.0
    %219 = vmatprep.subr.mxu0 0.0
    %220 = vmatpush1.msra.mxu0 0.0
    %221 = vmatprep.subr.mxu0 0.0
    %222 = vmatpush1.msra.mxu0 0.0
    %223 = vmatprep.subr.mxu0 0.0
    %224 = vmatpush1.msra.mxu0 0.0
    %225 = vmatprep.subr.mxu0 0.0
    %226 = vmatpush1.msra.mxu0 0.0
    %227 = vmatprep.subr.mxu0 0.0
    %228 = vmatpush1.msra.mxu0 0.0
    %229 = vmatprep.subr.mxu0 0.0
    %230 = vmatpush1.msra.mxu0 0.0
    %231 = vmatprep.subr.mxu0 0.0
    %232 = vmatpush1.msra.mxu0 0.0
    %233 = vmatprep.subr.mxu0 0.0
    %234 = vmatpush1.msra.mxu0 0.0
    %235 = vmatprep.subr.mxu0 0.0
    %236 = vmatpush1.msra.mxu0 0.0
    %237 = vmatprep.subr.mxu0 0.0
    %238 = vmatpush1.msra.mxu0 0.0
    %239 = vmatprep.subr.mxu0 0.0
    %240 = vmatpush1.msra.mxu0 0.0
    %241 = vmatprep.subr.mxu0 0.0
    %242 = vmatpush1.msra.mxu0 0.0
    %243 = vmatprep.subr.mxu0 0.0
    %244 = vmatpush1.msra.mxu0 0.0
    %245 = vmatprep.subr.mxu0 0.0
    %246 = vmatpush1.msra.mxu0 0.0
    %247 = vmatprep.subr.mxu0 0.0
    %248 = vmatpush1.msra.mxu0 0.0
    %249 = vmatprep.subr.mxu0 0.0
    %250 = vmatpush1.msra.mxu0 0.0
    %251 = vmatprep.subr.mxu0 0.0
    %252 = vmatpush1.msra.mxu0 0.0
    %253 = vmatprep.subr.mxu0 0.0
    %254 = vmatpush1.msra.mxu0 0.0
    %255 = vmatprep.subr.mxu0 0.0
    %256 = vmatpush1.msra.mxu0 0.0
    %257 = vmatprep.subr.mxu0 0.0
    %258 = vmatpush1.msra.mxu0 0.0
    %259 = vmatprep.subr.mxu0 0.0
    %260 = vmatpush1.msra.mxu0 0.0
    %261 = vmatprep.subr.mxu0 0.0
    %262 = vmatpush1.msra.mxu0 0.0
    %263 = vmatprep.subr.mxu0 0.0
    %264 = vmatpush1.msra.mxu0 0.0
    %265 = vmatprep.subr.mxu0 0.0
    %266 = vmatpush1.msra.mxu0 0.0
    %267 = vmatprep.subr.mxu0 0.0
    %268 = vmatpush1.msra.mxu0 0.0
    %269 = vmatprep.subr.mxu0 0.0
    %270 = vmatpush1.msra.mxu0 0.0
    %271 = vmatprep.subr.mxu0 0.0
    %272 = vmatpush1.msra.mxu0 0.0
    %273 = vmatprep.subr.mxu0 0.0
    %274 = vmatpush1.msra.mxu0 0.0
    %275 = vmatprep.subr.mxu0 0.0
    %276 = vmatpush1.msra.mxu0 0.0
    %277 = vmatprep.mubr.f32.mxu0 0.0
    %278 = vmatmul.mubr.f32.gmra.mrb[0].mxu0 %v208
    %v279 = vpop.f32.mrb[0].mxu0
    %v280 = vadd.f32 %v128, %v279
    %v281 = vpop.f32.mrb[0].mxu0
    %282 = vdwg.mxu0
    %v283 = vmax.f32 %v280, 0.0
    %284 = vrot.lane.b32.xlu0 %v283, 9
    %v285 = vpop.permute.xlu0 %284
    %v286 = vlaneseq
    %v287 = vshrl.u32 %v286, 7
    %v288 = vsub.s32 0, %v287
    %v289 = vrot.slane %v126, %v288
    %v290 = vmul.f32 %v285, %v289
    %291 = vrot.lane.b32.xlu0 %v283, 8
    %v292 = vpop.permute.xlu0 %291
    %v293 = vlaneseq
    %v294 = vshrl.u32 %v293, 7
    %v295 = vsub.s32 1, %v294
    %v296 = vrot.slane %v126, %v295
    %v297 = vmul.f32 %v292, %v296
    %298 = vrot.lane.b32.xlu0 %v283, 7
    %v299 = vpop.permute.xlu0 %298
    %v300 = vlaneseq
    %v301 = vshrl.u32 %v300, 7
    %v302 = vsub.s32 2, %v301
    %v303 = vrot.slane %v126, %v302
    %v304 = vmul.f32 %v299, %v303
    %305 = vrot.lane.b32.xlu0 %v283, 1
    %v306 = vpop.permute.xlu0 %305
    %v307 = vlaneseq
    %v308 = vshrl.u32 %v307, 7
    %v309 = vsub.s32 3, %v308
    %v310 = vrot.slane %v126, %v309
    %v311 = vmul.f32 %v306, %v310
    %312 = vrot.lane.b32.xlu0 %v283, 127
    %v313 = vpop.permute.xlu0 %312
    %v314 = vlaneseq
    %v315 = vshrl.u32 %v314, 7
    %v316 = vsub.s32 5, %v315
    %v317 = vrot.slane %v126, %v316
    %v318 = vmul.f32 %v313, %v317
    %319 = vrot.lane.b32.xlu0 %v283, 121
    %v320 = vpop.permute.xlu0 %319
    %v321 = vlaneseq
    %v322 = vshrl.u32 %v321, 7
    %v323 = vsub.s32 6, %v322
    %v324 = vrot.slane %v126, %v323
    %v325 = vmul.f32 %v320, %v324
    %326 = vrot.lane.b32.xlu0 %v283, 120
    %v327 = vpop.permute.xlu0 %326
    %v328 = vlaneseq
    %v329 = vshrl.u32 %v328, 7
    %v330 = vsub.s32 7, %v329
    %v331 = vrot.slane %v126, %v330
    %v332 = vmul.f32 %v327, %v331
    %333 = vrot.lane.b32.xlu0 %v283, 119
    %v334 = vpop.permute.xlu0 %333
    %v335 = vlaneseq
    %v336 = vshrl.u32 %v335, 7
    %v337 = vsub.s32 0, %v336
    %v338 = vrot.slane %v127, %v337
    %v339 = vmul.f32 %v334, %v338
    %vm340 = vcmask 588800
    %v342 = vsel %vm340, %v133, 0
    %v345 = vsel %vm340, %v134, 0
    %347 = vmatprep.subr.mxu0 0.0
    %348 = vmatpush1.msra.mxu0 %v290
    %349 = vmatprep.subr.mxu0 0.0
    %350 = vmatpush1.msra.mxu0 %v297
    %351 = vmatprep.subr.mxu0 0.0
    %352 = vmatpush1.msra.mxu0 %v304
    %353 = vmatprep.subr.mxu0 0.0
    %354 = vmatpush1.msra.mxu0 %v311
    %355 = vmatprep.subr.mxu0 0.0
    %356 = vmatpush1.msra.mxu0 %v283
    %357 = vmatprep.subr.mxu0 0.0
    %358 = vmatpush1.msra.mxu0 %v318
    %359 = vmatprep.subr.mxu0 0.0
    %360 = vmatpush1.msra.mxu0 %v325
    %361 = vmatprep.subr.mxu0 0.0
    %362 = vmatpush1.msra.mxu0 %v332
    %363 = vmatprep.subr.mxu0 0.0
    %364 = vmatpush1.msra.mxu0 %v339
    %365 = vmatprep.subr.mxu0 0.0
    %366 = vmatpush1.msra.mxu0 0.0
    %367 = vmatprep.subr.mxu0 0.0
    %368 = vmatpush1.msra.mxu0 0.0
    %369 = vmatprep.subr.mxu0 0.0
    %370 = vmatpush1.msra.mxu0 0.0
    %371 = vmatprep.subr.mxu0 0.0
    %372 = vmatpush1.msra.mxu0 0.0
    %373 = vmatprep.subr.mxu0 0.0
    %374 = vmatpush1.msra.mxu0 0.0
    %375 = vmatprep.subr.mxu0 0.0
    %376 = vmatpush1.msra.mxu0 0.0
    %377 = vmatprep.subr.mxu0 0.0
    %378 = vmatpush1.msra.mxu0 0.0
    %379 = vmatprep.subr.mxu0 0.0
    %380 = vmatpush1.msra.mxu0 0.0
    %381 = vmatprep.subr.mxu0 0.0
    %382 = vmatpush1.msra.mxu0 0.0
    %383 = vmatprep.subr.mxu0 0.0
    %384 = vmatpush1.msra.mxu0 0.0
    %385 = vmatprep.subr.mxu0 0.0
    %386 = vmatpush1.msra.mxu0 0.0
    %387 = vmatprep.subr.mxu0 0.0
    %388 = vmatpush1.msra.mxu0 0.0
    %389 = vmatprep.subr.mxu0 0.0
    %390 = vmatpush1.msra.mxu0 0.0
    %391 = vmatprep.subr.mxu0 0.0
    %392 = vmatpush1.msra.mxu0 0.0
    %393 = vmatprep.subr.mxu0 0.0
    %394 = vmatpush1.msra.mxu0 0.0
    %395 = vmatprep.subr.mxu0 0.0
    %396 = vmatpush1.msra.mxu0 0.0
    %397 = vmatprep.subr.mxu0 0.0
    %398 = vmatpush1.msra.mxu0 0.0
    %399 = vmatprep.subr.mxu0 0.0
    %400 = vmatpush1.msra.mxu0 0.0
    %401 = vmatprep.subr.mxu0 0.0
    %402 = vmatpush1.msra.mxu0 0.0
    %403 = vmatprep.subr.mxu0 0.0
    %404 = vmatpush1.msra.mxu0 0.0
    %405 = vmatprep.subr.mxu0 0.0
    %406 = vmatpush1.msra.mxu0 0.0
    %407 = vmatprep.subr.mxu0 0.0
    %408 = vmatpush1.msra.mxu0 0.0
    %409 = vmatprep.subr.mxu0 0.0
    %410 = vmatpush1.msra.mxu0 0.0
    %411 = vmatprep.mubr.f32.mxu0 0.0
    %412 = vmatmul.mubr.f32.gmra.mrb[0].mxu0 %v342
    %v413 = vpop.f32.mrb[0].mxu0
    %v414 = vadd.f32 %v129, %v413
    %v415 = vpop.f32.mrb[0].mxu0
    %416 = vmatprep.mubr.f32.mxu0 0.0
    %417 = vmatmul.mubr.f32.gmra.mrb[0].mxu0 %v345
    %v418 = vpop.f32.mrb[0].mxu0
    %v419 = vadd.f32 %v130, %v418
    %v420 = vpop.f32.mrb[0].mxu0
    %421 = vdwg.mxu0
    %v422 = vmax.f32 %v414, 0.0
    %v423 = vmax.f32 %v419, 0.0
    %424 = vrot.lane.b32.xlu0 %v422, 9
    %v425 = vpop.permute.xlu0 %424
    %426 = vrot.lane.b32.xlu0 %v423, 9
    %v427 = vpop.permute.xlu0 %426
    %v428 = vmul.f32 %v425, %v289
    %v429 = vmul.f32 %v427, %v289
    %430 = vrot.lane.b32.xlu0 %v422, 8
    %v431 = vpop.permute.xlu0 %430
    %432 = vrot.lane.b32.xlu0 %v423, 8
    %v433 = vpop.permute.xlu0 %432
    %v434 = vmul.f32 %v431, %v296
    %v435 = vmul.f32 %v433, %v296
    %436 = vrot.lane.b32.xlu0 %v422, 7
    %v437 = vpop.permute.xlu0 %436
    %438 = vrot.lane.b32.xlu0 %v423, 7
    %v439 = vpop.permute.xlu0 %438
    %v440 = vmul.f32 %v437, %v303
    %v441 = vmul.f32 %v439, %v303
    %442 = vrot.lane.b32.xlu0 %v422, 1
    %v443 = vpop.permute.xlu0 %442
    %444 = vrot.lane.b32.xlu0 %v423, 1
    %v445 = vpop.permute.xlu0 %444
    %v446 = vmul.f32 %v443, %v310
    %v447 = vmul.f32 %v445, %v310
    %448 = vrot.lane.b32.xlu0 %v422, 127
    %v449 = vpop.permute.xlu0 %448
    %450 = vrot.lane.b32.xlu0 %v423, 127
    %v451 = vpop.permute.xlu0 %450
    %v452 = vmul.f32 %v449, %v317
    %v453 = vmul.f32 %v451, %v317
    %454 = vrot.lane.b32.xlu0 %v422, 121
    %v455 = vpop.permute.xlu0 %454
    %456 = vrot.lane.b32.xlu0 %v423, 121
    %v457 = vpop.permute.xlu0 %456
    %v458 = vmul.f32 %v455, %v324
    %v459 = vmul.f32 %v457, %v324
    %460 = vrot.lane.b32.xlu0 %v422, 120
    %v461 = vpop.permute.xlu0 %460
    %462 = vrot.lane.b32.xlu0 %v423, 120
    %v463 = vpop.permute.xlu0 %462
    %v464 = vmul.f32 %v461, %v331
    %v465 = vmul.f32 %v463, %v331
    %466 = vrot.lane.b32.xlu0 %v422, 119
    %v467 = vpop.permute.xlu0 %466
    %468 = vrot.lane.b32.xlu0 %v423, 119
    %v469 = vpop.permute.xlu0 %468
    %v470 = vmul.f32 %v467, %v338
    %v471 = vmul.f32 %v469, %v338
    %vm472 = vcmask 130048
    %v474 = vsel %vm472, %v136, 0
    %476 = vmatprep.subr.mxu0 0.0
    %477 = vmatpush1.msra.mxu0 %v428
    %478 = vmatprep.subr.mxu0 0.0
    %479 = vmatpush1.msra.mxu0 %v429
    %480 = vmatprep.subr.mxu0 0.0
    %481 = vmatpush1.msra.mxu0 %v434
    %482 = vmatprep.subr.mxu0 0.0
    %483 = vmatpush1.msra.mxu0 %v435
    %484 = vmatprep.subr.mxu0 0.0
    %485 = vmatpush1.msra.mxu0 %v440
    %486 = vmatprep.subr.mxu0 0.0
    %487 = vmatpush1.msra.mxu0 %v441
    %488 = vmatprep.subr.mxu0 0.0
    %489 = vmatpush1.msra.mxu0 %v446
    %490 = vmatprep.subr.mxu0 0.0
    %491 = vmatpush1.msra.mxu0 %v447
    %492 = vmatprep.subr.mxu0 0.0
    %493 = vmatpush1.msra.mxu0 %v422
    %494 = vmatprep.subr.mxu0 0.0
    %495 = vmatpush1.msra.mxu0 %v423
    %496 = vmatprep.subr.mxu0 0.0
    %497 = vmatpush1.msra.mxu0 %v452
    %498 = vmatprep.subr.mxu0 0.0
    %499 = vmatpush1.msra.mxu0 %v453
    %500 = vmatprep.subr.mxu0 0.0
    %501 = vmatpush1.msra.mxu0 %v458
    %502 = vmatprep.subr.mxu0 0.0
    %503 = vmatpush1.msra.mxu0 %v459
    %504 = vmatprep.subr.mxu0 0.0
    %505 = vmatpush1.msra.mxu0 %v464
    %506 = vmatprep.subr.mxu0 0.0
    %507 = vmatpush1.msra.mxu0 %v465
    %508 = vmatprep.subr.mxu0 0.0
    %509 = vmatpush1.msra.mxu0 %v470
    %510 = vmatprep.subr.mxu0 0.0
    %511 = vmatpush1.msra.mxu0 %v471
    %512 = vmatprep.subr.mxu0 0.0
    %513 = vmatpush1.msra.mxu0 0.0
    %514 = vmatprep.subr.mxu0 0.0
    %515 = vmatpush1.msra.mxu0 0.0
    %516 = vmatprep.subr.mxu0 0.0
    %517 = vmatpush1.msra.mxu0 0.0
    %518 = vmatprep.subr.mxu0 0.0
    %519 = vmatpush1.msra.mxu0 0.0
    %520 = vmatprep.subr.mxu0 0.0
    %521 = vmatpush1.msra.mxu0 0.0
    %522 = vmatprep.subr.mxu0 0.0
    %523 = vmatpush1.msra.mxu0 0.0
    %524 = vmatprep.subr.mxu0 0.0
    %525 = vmatpush1.msra.mxu0 0.0
    %526 = vmatprep.subr.mxu0 0.0
    %527 = vmatpush1.msra.mxu0 0.0
    %528 = vmatprep.subr.mxu0 0.0
    %529 = vmatpush1.msra.mxu0 0.0
    %530 = vmatprep.subr.mxu0 0.0
    %531 = vmatpush1.msra.mxu0 0.0
    %532 = vmatprep.subr.mxu0 0.0
    %533 = vmatpush1.msra.mxu0 0.0
    %534 = vmatprep.subr.mxu0 0.0
    %535 = vmatpush1.msra.mxu0 0.0
    %536 = vmatprep.subr.mxu0 0.0
    %537 = vmatpush1.msra.mxu0 0.0
    %538 = vmatprep.subr.mxu0 0.0
    %539 = vmatpush1.msra.mxu0 0.0
    %540 = vmatprep.mubr.f32.mxu0 %v474
    %541 = vmatmul.mubr.f32.gmra.mrb[0].mxu0 %v135
    %v542 = vpop.f32.mrb[0].mxu0
    %v543 = vadd.f32 0.0, %v542
    %v544 = vpop.f32.mrb[0].mxu0
    %545 = vdwg.mxu0
    %v546 = vadd.f32 %v543, %v131
    %vm547 = vcmp.gt.f32.partialorder %v546, 20.0
    %v548 = vmin.f32 %v546, 20.0
    %v549 = vmul.f32 %v548, 1.442695
    %v550 = vpow.pop %v549
    %v551 = vadd.f32 %v550, 1.0
    %v552 = vlog2.pop %v551
    %v553 = vmul.f32 %v552, 0.6931472
    %v554 = vsel %vm547, %v546, %v553
    %555 = vst [vmem:[#allocation8] sm:$0x1] %v554
    // Predicated region
    $region26: #{tpu_custom_call.1} parent=1 // pred_check
      _
    $region27: #{tpu_custom_call.1} parent=1 // pred_check_branch
      %557 = sbr.rel (0) target = $region29
    $region28: #{tpu_custom_call.1} parent=1 // pred_region
      %s559 = ssub.s32 16, 16
      %560 = vsyncadd [#allocation4], %s559
      %s562 = sshll.u32 [#allocation8], 4
      %s563 = int_to_ptr.vmem [resolvable:$true] %s562
      %565 = dma.vmem_to_hbm [thread:$0]  %s563, 16, %s3, [#allocation4]
    $region29: #{tpu_custom_call.1} parent=1 // pred_fallthru
      _
    // Predicated region
    $region30: #{tpu_custom_call.1} parent=1 // pred_check
      _
    $region31: #{tpu_custom_call.1} parent=1 // pred_check_branch
      %567 = sbr.rel (0) target = $region33
    $region32: #{tpu_custom_call.1} parent=1 // pred_region
      %568 = dma.done [#allocation4], 16
    $region33: #{tpu_custom_call.1} parent=1 // pred_fallthru
      _
    %569 = vsyncpa [#allocation3], 1
    %570 = vsyncpa [#allocation6], 1
    %571 = vsyncpa [#allocation4], 1

</llo_original>
